<compile_context>
chip_gen: v7x
topology: tpu7x:2x2x1
jax: 0.10.0
libtpu: 0.0.40
codegen_flags: <defaults>
</compile_context>

<pallas_src>
import functools

import numpy as np
import jax
import jax.numpy as jnp
from jax.experimental import pallas as pl
from jax.experimental.pallas import tpu as pltpu


def _round_up(n: int, m: int) -> int:
    return ((n + m - 1) // m) * m


def _hartley_kernel(x_ref, w_ref, cs_ref, o_ref):
    """One grid step: TB batch elements.

    x_ref:  (TB, S, H)   input block (compute dtype)
    w_ref:  (H, 2H)      [C_H + S_H | C_H - S_H]  (zero padded)
    cs_ref: (S, 2S)      [C_S | S_S]              (zero padded)
    o_ref:  (TB, S, H)   output block (float32)
    """
    tb, s, h = x_ref.shape

    # Stage 1: hidden-dim mixing. One wide matmul for the whole batch block:
    # (TB*S, H) @ (H, 2H) -> (TB*S, 2H), f32 accumulation on the MXU.
    x2d = x_ref[...].reshape(tb * s, h)
    y = jnp.dot(x2d, w_ref[...], preferred_element_type=jnp.float32)

    cs2 = cs_ref[...]
    for b in range(tb):  # TB is a small compile-time constant (unrolled)
        # Static, tile-aligned slices: rows in multiples of S (mult of 8),
        # column split at H (mult of 128).
        y1 = y[b * s:(b + 1) * s, :h]
        y2 = y[b * s:(b + 1) * s, h:]
        # Stage 2: sequence-dim mixing + (real - imag) as ONE matmul
        # (S, 2S) @ (2S, H).  Concatenate in f32 (8-row aligned), then cast to
        # the weight dtype so bf16 weights still use the bf16 MXU path.
        ycat = jnp.concatenate([y1, y2], axis=0).astype(cs2.dtype)
        o_ref[b] = jnp.dot(
            cs2, ycat, preferred_element_type=jnp.float32).astype(o_ref.dtype)


@functools.lru_cache(maxsize=None)
def _hartley_weights(s: int, h: int, s_pad: int, h_pad: int, dtype_name: str):
    """DFT mixing matrices, built once per (S, H, pads, dtype) and cached.

    Angles use exact integer (j*k mod N) so large S/H don't lose precision to
    the f32 mantissa; trig is evaluated in float64 and cast at the end.
    """
    def cos_sin(n):
        idx = np.arange(n, dtype=np.int64)
        jk = (idx[:, None] * idx[None, :]) % n
        ang = (2.0 * np.pi / n) * jk.astype(np.float64)
        return np.cos(ang), np.sin(ang)

    c_h, s_h = cos_sin(h)
    c_s, s_s = cos_sin(s)

    w = np.zeros((h_pad, 2 * h_pad), dtype=np.float64)
    w[:h, :h] = c_h + s_h                     # P = C_H + S_H
    w[:h, h_pad:h_pad + h] = c_h - s_h        # Q = C_H - S_H

    cs2 = np.zeros((s_pad, 2 * s_pad), dtype=np.float64)
    cs2[:s, :s] = c_s
    cs2[:s, s_pad:s_pad + s] = s_s

    dtype = jnp.dtype(dtype_name)
    return jnp.asarray(w, dtype), jnp.asarray(cs2, dtype)


def _choose_block_b(b: int, s_pad: int, h_pad: int, itemsize: int) -> int:
    """Batch elements per grid step.

    Big enough to amortize per-step overhead and feed the MXU a tall M
    (= TB*S), small enough to keep the double-buffered x/out blocks plus the
    stage-1 intermediate well inside VMEM, and (when B allows) leaving >= 2
    grid steps so v7x's two TensorCores both get work.
    """
    def block_bytes(t):
        io = 2 * t * s_pad * h_pad * (itemsize + 4)   # dbl-buffered x + f32 out
        mid = 2 * t * s_pad * h_pad * 4               # (TB*S, 2H) f32 intermediate
        return io + mid

    tb = 1
    while tb < b and tb * s_pad < 512 and block_bytes(2 * tb) <= (8 << 20):
        tb *= 2
    while tb > 1 and (b + tb - 1) // tb < 2 and b >= 2:
        tb //= 2
    return tb


def hartley_token_mixer(x: jax.Array, *, compute_dtype=jnp.float32,
                        block_b: int | None = None) -> jax.Array:
    """real(fft(fft(x, -1), -2)) - imag(...) for real x of shape (B, S, H)."""
    B, S, H = x.shape
    compute_dtype = jnp.dtype(compute_dtype)
    out_dtype = jnp.float32

    # Lane/sublane-friendly padding (zero-padded weights keep the math exact).
    S_pad = _round_up(S, 8)
    H_pad = _round_up(H, 128)

    w, cs2 = _hartley_weights(S, H, S_pad, H_pad, compute_dtype.name)

    tb = block_b if block_b is not None else _choose_block_b(
        B, S_pad, H_pad, compute_dtype.itemsize)
    tb = max(1, min(int(tb), B))
    B_pad = _round_up(B, tb)
    grid_b = B_pad // tb

    xp = x.astype(compute_dtype)
    if (B_pad, S_pad, H_pad) != (B, S, H):
        xp = jnp.pad(xp, ((0, B_pad - B), (0, S_pad - S), (0, H_pad - H)))

    flops = 4 * B_pad * S_pad * H_pad * (H_pad + S_pad)
    bytes_accessed = (xp.size * compute_dtype.itemsize
                      + B_pad * S_pad * H_pad * 4
                      + (w.size + cs2.size) * compute_dtype.itemsize)

    # VMEM budget: double-buffered x/out blocks, (double-buffered) constant
    # weights, plus stage intermediates.  Matters at realistic S/H (esp. v7x).
    vmem_need = (2 * tb * S_pad * H_pad * (compute_dtype.itemsize + 4)
                 + 2 * (w.size + cs2.size) * compute_dtype.itemsize
                 + 4 * tb * S_pad * H_pad * 4)
    vmem_limit = int(max(32 << 20, vmem_need + (4 << 20)))

    out = pl.pallas_call(
        _hartley_kernel,
        out_shape=jax.ShapeDtypeStruct((B_pad, S_pad, H_pad), out_dtype),
        grid_spec=pltpu.PrefetchScalarGridSpec(
            num_scalar_prefetch=0,
            grid=(grid_b,),
            in_specs=[
                pl.BlockSpec((tb, S_pad, H_pad), lambda i: (i, 0, 0)),
                # Constant weights: index_map is constant across the grid so the
                # pipeline only fetches them once.
                # TODO(synk): single-buffer them (pipeline_mode=pl.Buffered(1))
                # to halve their VMEM footprint once that path is validated on
                # the target jax version.
                pl.BlockSpec((H_pad, 2 * H_pad), lambda i: (0, 0)),
                pl.BlockSpec((S_pad, 2 * S_pad), lambda i: (0, 0)),
            ],
            out_specs=pl.BlockSpec((tb, S_pad, H_pad), lambda i: (i, 0, 0)),
        ),
        compiler_params=pltpu.CompilerParams(
            dimension_semantics=("parallel",),
            vmem_limit_bytes=vmem_limit),
        cost_estimate=pl.CostEstimate(
            flops=int(flops),
            transcendentals=0,
            bytes_accessed=int(bytes_accessed)),
    )(xp, w, cs2)

    if (B_pad, S_pad, H_pad) != (B, S, H):
        out = out[:B, :S, :H]
    return out


if __name__ == "__main__":
    B, S, H = 2, 8, 32
    key = jax.random.PRNGKey(0)
    x = jax.random.normal(key, (B, S, H), dtype=jnp.float32)

    # Default f32 compute path.
    out = jax.block_until_ready(hartley_token_mixer(x))

    # Reference: plain JAX FFT, same math as the PyTorch module.
    mix = jnp.fft.fft(jnp.fft.fft(x, axis=-1), axis=-2)
    ref = jnp.real(mix) - jnp.imag(mix)
    assert out.shape == (B, S, H)
    assert jnp.allclose(out, ref, atol=1e-3, rtol=1e-3), float(
        jnp.max(jnp.abs(out - ref)))

    # Optional bf16 compute path (v6e/v7x MXU fast path), f32 accumulation.
    out_bf16 = jax.block_until_ready(
        hartley_token_mixer(x, compute_dtype=jnp.bfloat16))
    assert out_bf16.shape == (B, S, H)
    assert jnp.allclose(out_bf16, ref, atol=0.5, rtol=5e-2), float(
        jnp.max(jnp.abs(out_bf16 - ref)))

    print("KERNEL_OK")
</pallas_src>

<mosaic_0001>
module attributes {stable_mosaic.version = 11 : i64} {
  func.func @_hartley_kernel(%arg0: i32, %arg1: memref<1x8x128xf32, #tpu.memory_space<vmem>>, %arg2: memref<128x256xf32, #tpu.memory_space<vmem>>, %arg3: memref<8x16xf32, #tpu.memory_space<vmem>>, %arg4: memref<1x8x128xf32, #tpu.memory_space<vmem>>) attributes {dimension_semantics = [#tpu.dimension_semantics<parallel>], iteration_bounds = array<i64: 2>, scalar_prefetch = 0 : i64, scratch_operands = 0 : i64, tpu.core_type = #tpu.core_type<tc>, window_params = [{transform_indices = @transform_0, window_bounds = array<i64: 1, 8, 128>}, {pipeline_mode = #tpu.pipeline_mode<synchronous>, transform_indices = @transform_1, window_bounds = array<i64: 128, 256>}, {pipeline_mode = #tpu.pipeline_mode<synchronous>, transform_indices = @transform_2, window_bounds = array<i64: 8, 16>}, {transform_indices = @transform_3, window_bounds = array<i64: 1, 8, 128>}]} {
    %c0 = arith.constant 0 : index
    %c0_0 = arith.constant 0 : index
    %c0_1 = arith.constant 0 : index
    %0 = vector.load %arg1[%c0, %c0_0, %c0_1] : memref<1x8x128xf32, #tpu.memory_space<vmem>>, vector<1x8x128xf32>
    %1 = vector.shape_cast %0 : vector<1x8x128xf32> to vector<8x128xf32>
    %c0_2 = arith.constant 0 : index
    %c0_3 = arith.constant 0 : index
    %2 = vector.load %arg2[%c0_2, %c0_3] : memref<128x256xf32, #tpu.memory_space<vmem>>, vector<128x256xf32>
    %cst = arith.constant dense<0.000000e+00> : vector<8x256xf32>
    %3 = tpu.matmul %1, %2, %cst {dimension_numbers = #tpu.dot_dimension_numbers<[1], [0], [0], [1], [0, 0, 1, 1], [], []>} : vector<8x128xf32>, vector<128x256xf32>, vector<8x256xf32> -> vector<8x256xf32>
    %c0_4 = arith.constant 0 : index
    %c0_5 = arith.constant 0 : index
    %4 = vector.load %arg3[%c0_4, %c0_5] : memref<8x16xf32, #tpu.memory_space<vmem>>, vector<8x16xf32>
    %5 = vector.extract_strided_slice %3 {offsets = [0, 0], sizes = [8, 128], strides = [1, 1]} : vector<8x256xf32> to vector<8x128xf32>
    %6 = vector.extract_strided_slice %3 {offsets = [0, 128], sizes = [8, 128], strides = [1, 1]} : vector<8x256xf32> to vector<8x128xf32>
    %7 = tpu.concatenate %5, %6 in 0 : vector<8x128xf32>, vector<8x128xf32> -> vector<16x128xf32>
    %cst_6 = arith.constant dense<0.000000e+00> : vector<8x128xf32>
    %8 = tpu.matmul %4, %7, %cst_6 {dimension_numbers = #tpu.dot_dimension_numbers<[1], [0], [0], [1], [0, 0, 1, 1], [], []>} : vector<8x16xf32>, vector<16x128xf32>, vector<8x128xf32> -> vector<8x128xf32>
    %c0_7 = arith.constant 0 : index
    %c0_8 = arith.constant 0 : index
    %c0_9 = arith.constant 0 : index
    %9 = vector.load %arg4[%c0_7, %c0_8, %c0_9] : memref<1x8x128xf32, #tpu.memory_space<vmem>>, vector<1x8x128xf32>
    %10 = vector.shape_cast %9 : vector<1x8x128xf32> to vector<8x128xf32>
    %11 = vector.shape_cast %8 : vector<8x128xf32> to vector<1x8x128xf32>
    tpu.vector_store %arg4[%c0_7, %c0_8, %c0_9], %11 {strides = array<i32>} : memref<1x8x128xf32, #tpu.memory_space<vmem>>, vector<1x8x128xf32>,
    return
  }
  func.func @transform_0(%arg0: i32) -> (i32, i32, i32) {
    %c0_i32 = arith.constant 0 : i32
    %c0_i32_0 = arith.constant 0 : i32
    %c0_i32_1 = arith.constant 0 : i32
    return %arg0, %c0_i32, %c0_i32_0 : i32, i32, i32
  }
  func.func @transform_1(%arg0: i32) -> (i32, i32) {
    %c0_i32 = arith.constant 0 : i32
    %c0_i32_0 = arith.constant 0 : i32
    %c0_i32_1 = arith.constant 0 : i32
    return %c0_i32, %c0_i32_0 : i32, i32
  }
  func.func @transform_2(%arg0: i32) -> (i32, i32) {
    %c0_i32 = arith.constant 0 : i32
    %c0_i32_0 = arith.constant 0 : i32
    %c0_i32_1 = arith.constant 0 : i32
    return %c0_i32, %c0_i32_0 : i32, i32
  }
  func.func @transform_3(%arg0: i32) -> (i32, i32, i32) {
    %c0_i32 = arith.constant 0 : i32
    %c0_i32_0 = arith.constant 0 : i32
    %c0_i32_1 = arith.constant 0 : i32
    return %arg0, %c0_i32, %c0_i32_0 : i32, i32, i32
  }
}

</mosaic_0001>

<llo_original>
// kernel: tpu_custom_call.1
$region0: #{tpu_custom_call.1}
  #allocation0 [shape = 'u32[]', space=smem, size = 0x4, offset = 0x4, fixed_abs, tag = 'smem constant byte address 0x4 - core index']
  #allocation1 [shape = 'u32[144,128]{1,0:T(1,128)}', space=vmem, size = 0x12000, scoped, tag = 'internal scratch']
  %s0 = inlined_call_operand.hbm [shape: f32[2,8,128], index: 0, kind: input, shape index: {}]
  %s1 = inlined_call_operand.hbm [shape: f32[128,256], index: 1, kind: input, shape index: {}]
  %s2 = inlined_call_operand.hbm [shape: f32[8,16], index: 2, kind: input, shape index: {}]
  %s3 = inlined_call_operand.hbm [shape: f32[2,8,128], index: 3, kind: output, shape index: {}]
  %s4 = sld [smem:[#allocation0]]
  $region57: #{tpu_custom_call.1} parent=0
    _
  %s6 = ssub.s32 1, %s4
  %s7 = scalar_select 0, %s6, %s4
  $region1: #{tpu_custom_call.1} parent=0
    #allocation2 [shape = 'u8[8192]{0}', space=vmem, size = 0x2000, scoped, tag = 'input window, operand 0']
    #allocation3 [shape = 's32[2]{0}', space=sflag, size = 0x8, scoped, tag = 'scoped memory for tpu_custom_call.1']
    #allocation4 [shape = 's32[2]{0}', space=sflag, size = 0x8, scoped, tag = 'scoped memory for tpu_custom_call.1']
    #allocation5 [shape = 'u8[131072]{0}', space=vmem, size = 0x20000, scoped, tag = 'input window, operand 1, single buffered']
    #allocation6 [shape = 's32[1]{0}', space=sflag, size = 0x4, scoped, tag = 'scoped memory for tpu_custom_call.1']
    #allocation7 [shape = 'u8[4096]{0}', space=vmem, size = 0x1000, scoped, tag = 'input window, operand 2, single buffered']
    #allocation8 [shape = 'u8[8192]{0}', space=vmem, size = 0x2000, scoped, tag = 'output window, operand 0']
    %8 = vsyncpa [#allocation3], 0
    %s9 = scalar_lea.sflag [#allocation3], 1
    %10 = vsyncpa %s9, 0
    %11 = vsyncpa [#allocation6], 0
    %12 = vsyncpa [#allocation4], 0
    %s13 = scalar_lea.sflag [#allocation4], 1
    %14 = vsyncpa %s13, 0
    loop: start=0, step=1, limit=4
    $region2: #{tpu_custom_call.1} parent=1 // loop_pre_header
      _
    $region3: #{tpu_custom_call.1} parent=1 // loop_header
      %s16 = sphi 0, %s20
      %p17 = scmp.ge.s32.totalorder %s16, 4
      %s26 = sphi 0, %s28
      %s29 = sphi 0, %s26
      %s30 = sphi 0, %s29
      %s46 = sphi 0, %s30
      %s50 = sphi 0, %s50
      %s52 = sphi 0, %s50
      %s53 = sphi 0, %s52
      %s67 = sphi 0, %s53
      %s71 = sphi 0, %s71
      %s73 = sphi 0, %s71
      %s74 = sphi 0, %s73
      %s88 = sphi 0, %s74
      %s94 = sphi 0, %s96
      %s97 = sphi 0, %s94
      %s98 = sphi 0, %s97
      %s114 = sphi 0, %s98
    $region4: #{tpu_custom_call.1} parent=1 // loop_header_branch
      %19 = sbr.rel (%p17) target = $region8
    $region5: #{tpu_custom_call.1} parent=1 // loop_body
      %s21 = ssub.s32 %s16, 1
      %s22 = ssub.s32 %s16, 2
      %s23 = sadd.s32 %s16, 1
      %s24 = ssub.s32 %s16, %s23
      %p25 = scmp.eq.s32.totalorder %s24, 0
      %s27 = sadd.s32 %s26, 1
      %s28 = scalar_select %p25, %s26, %s27
      %p31 = pneg %p25
      %p32 = scmp.eq.s32.totalorder %s16, 1
      %p33 = por %p31, %p32
      %p34 = scmp.ne.s32.totalorder %s26, %s29
      %p35 = scmp.eq.s32.totalorder %s16, 0
      %p36 = por %p34, %p35
      %p37 = scmp.ne.s32.totalorder %s26, %s29
      %p38 = scmp.eq.s32.totalorder %s21, 1
      %p39 = por %p37, %p38
      %p40 = scmp.ne.s32.totalorder %s29, %s30
      %p41 = scmp.eq.s32.totalorder %s21, 0
      %p42 = por %p40, %p41
      %p43 = scmp.ne.s32.totalorder %s29, %s30
      %p44 = scmp.eq.s32.totalorder %s22, 1
      %p45 = por %p43, %p44
      %p47 = scmp.ne.s32.totalorder %s30, %s46
      %p48 = scmp.eq.s32.totalorder %s22, 0
      %p49 = por %p47, %p48
      %s51 = sadd.s32 %s50, 1
      %p54 = scmp.eq.s32.totalorder %s16, 1
      %p55 = scmp.ne.s32.totalorder %s50, %s52
      %p56 = scmp.eq.s32.totalorder %s16, 0
      %p57 = por %p55, %p56
      %p58 = scmp.ne.s32.totalorder %s50, %s52
      %p59 = scmp.eq.s32.totalorder %s21, 1
      %p60 = por %p58, %p59
      %p61 = scmp.ne.s32.totalorder %s52, %s53
      %p62 = scmp.eq.s32.totalorder %s21, 0
      %p63 = por %p61, %p62
      %p64 = scmp.ne.s32.totalorder %s52, %s53
      %p65 = scmp.eq.s32.totalorder %s22, 1
      %p66 = por %p64, %p65
      %p68 = scmp.ne.s32.totalorder %s53, %s67
      %p69 = scmp.eq.s32.totalorder %s22, 0
      %p70 = por %p68, %p69
      %s72 = sadd.s32 %s71, 1
      %p75 = scmp.eq.s32.totalorder %s16, 1
      %p76 = scmp.ne.s32.totalorder %s71, %s73
      %p77 = scmp.eq.s32.totalorder %s16, 0
      %p78 = por %p76, %p77
      %p79 = scmp.ne.s32.totalorder %s71, %s73
      %p80 = scmp.eq.s32.totalorder %s21, 1
      %p81 = por %p79, %p80
      %p82 = scmp.ne.s32.totalorder %s73, %s74
      %p83 = scmp.eq.s32.totalorder %s21, 0
      %p84 = por %p82, %p83
      %p85 = scmp.ne.s32.totalorder %s73, %s74
      %p86 = scmp.eq.s32.totalorder %s22, 1
      %p87 = por %p85, %p86
      %p89 = scmp.ne.s32.totalorder %s74, %s88
      %p90 = scmp.eq.s32.totalorder %s22, 0
      %p91 = por %p89, %p90
      %s92 = ssub.s32 %s16, %s23
      %p93 = scmp.eq.s32.totalorder %s92, 0
      %s95 = sadd.s32 %s94, 1
      %s96 = scalar_select %p93, %s94, %s95
      %p99 = pneg %p93
      %p100 = scmp.eq.s32.totalorder %s16, 1
      %p101 = por %p99, %p100
      %p102 = scmp.ne.s32.totalorder %s94, %s97
      %p103 = scmp.eq.s32.totalorder %s16, 0
      %p104 = por %p102, %p103
      %p105 = scmp.ne.s32.totalorder %s94, %s97
      %p106 = scmp.eq.s32.totalorder %s21, 1
      %p107 = por %p105, %p106
      %p108 = scmp.ne.s32.totalorder %s97, %s98
      %p109 = scmp.eq.s32.totalorder %s21, 0
      %p110 = por %p108, %p109
      %p111 = scmp.ne.s32.totalorder %s97, %s98
      %p112 = scmp.eq.s32.totalorder %s22, 1
      %p113 = por %p111, %p112
      %p115 = scmp.ne.s32.totalorder %s98, %s114
      %p116 = scmp.eq.s32.totalorder %s22, 0
      %p117 = por %p115, %p116
      %p118 = scmp.le.s32.totalorder 1, %s16
      %p119 = scmp.lt.s32.totalorder %s16, 3
      %p120 = pnand %p118, %p119
      %p121 = pneg %p120
      // Predicated region
      $region9: #{tpu_custom_call.1} parent=5 // pred_check
        _
      $region10: #{tpu_custom_call.1} parent=5 // pred_check_branch
        %123 = sbr.rel (%p120) target = $region12
      $region11: #{tpu_custom_call.1} parent=5 // pred_region
        %s124 = ssub.s32 %s16, 1
        // Predicated region
        $region13: #{tpu_custom_call.1} parent=11 // pred_check
          %p125 = pneg %p63
        $region14: #{tpu_custom_call.1} parent=11 // pred_check_branch
          %127 = sbr.rel (%p125) target = $region16
        $region15: #{tpu_custom_call.1} parent=11 // pred_region
          %s129 = ssub.s32 4096, 4096
          %130 = vsyncadd [#allocation6], %s129
          %s131 = sshll.u32 [#allocation5], 4
          %s132 = int_to_ptr.vmem [resolvable:$true] %s131
          %137 = dma.hbm_to_vmem [thread:$0]  %s1, 4096, %s132, [#allocation6], 256, 256, 16
        $region16: #{tpu_custom_call.1} parent=11 // pred_fallthru
          _
        // Predicated region
        $region17: #{tpu_custom_call.1} parent=11 // pred_check
          %p138 = pneg %p84
        $region18: #{tpu_custom_call.1} parent=11 // pred_check_branch
          %140 = sbr.rel (%p138) target = $region20
        $region19: #{tpu_custom_call.1} parent=11 // pred_region
          %s142 = ssub.s32 128, 128
          %143 = vsyncadd [#allocation6], %s142
          %s145 = sshll.u32 [#allocation7], 4
          %s146 = int_to_ptr.vmem [resolvable:$true] %s145
          %148 = dma.hbm_to_vmem [thread:$0]  %s2, 128, %s146, [#allocation6]
        $region20: #{tpu_custom_call.1} parent=11 // pred_fallthru
          _
      $region12: #{tpu_custom_call.1} parent=5 // pred_fallthru
        _
      %p149 = scmp.lt.s32.totalorder %s16, 2
      // Predicated region
      $region21: #{tpu_custom_call.1} parent=5 // pred_check
        %p150 = pneg %p149
      $region22: #{tpu_custom_call.1} parent=5 // pred_check_branch
        %152 = sbr.rel (%p150) target = $region24
      $region23: #{tpu_custom_call.1} parent=5 // pred_region
        // Predicated region
        $region25: #{tpu_custom_call.1} parent=23 // pred_check
          %p153 = pneg %p36
        $region26: #{tpu_custom_call.1} parent=23 // pred_check_branch
          %155 = sbr.rel (%p153) target = $region28
        $region27: #{tpu_custom_call.1} parent=23 // pred_region
          %s156 = sand.u32 %s26, 1
          %s157 = scalar_lea.sflag [#allocation3], %s156
          %s158 = sand.u32 %s26, 1
          %s159 = smul.addr %s158, 8
          %s160 = scalar_lea.vmem [#allocation2], %s159
          %s162 = ssub.s32 128, 128
          %163 = vsyncadd %s157, %s162
          %s164 = smul.addr %s16, 128
          %s165 = scalar_lea.hbm %s0, %s164
          %s167 = sshll.u32 %s160, 4
          %s168 = int_to_ptr.vmem [resolvable:$true] %s167
          %170 = dma.hbm_to_vmem [thread:$0]  %s165, 128, %s168, %s157
        $region28: #{tpu_custom_call.1} parent=23 // pred_fallthru
          _
      $region24: #{tpu_custom_call.1} parent=5 // pred_fallthru
        _
      %p171 = scmp.le.s32.totalorder 1, %s16
      %p172 = scmp.lt.s32.totalorder %s16, 3
      %p173 = pnand %p171, %p172
      %p174 = pneg %p173
      // Predicated region
      $region29: #{tpu_custom_call.1} parent=5 // pred_check
        _
      $region30: #{tpu_custom_call.1} parent=5 // pred_check_branch
        %176 = sbr.rel (%p173) target = $region32
      $region31: #{tpu_custom_call.1} parent=5 // pred_region
        %s177 = ssub.s32 %s16, 1
        %s178 = sand.u32 %s29, 1
        %s179 = scalar_lea.sflag [#allocation3], %s178
        %s180 = sand.u32 %s29, 1
        %s181 = smul.addr %s180, 8
        %s182 = scalar_lea.vmem [#allocation2], %s181
        // Predicated region
        $region33: #{tpu_custom_call.1} parent=31 // pred_check
          %p183 = pneg %p42
        $region34: #{tpu_custom_call.1} parent=31 // pred_check_branch
          %185 = sbr.rel (%p183) target = $region36
        $region35: #{tpu_custom_call.1} parent=31 // pred_region
          %186 = dma.done %s179, 128
        $region36: #{tpu_custom_call.1} parent=31 // pred_fallthru
          _
        // Predicated region
        $region37: #{tpu_custom_call.1} parent=31 // pred_check
          %p187 = pneg %p63
        $region38: #{tpu_custom_call.1} parent=31 // pred_check_branch
          %189 = sbr.rel (%p187) target = $region40
        $region39: #{tpu_custom_call.1} parent=31 // pred_region
          %190 = dma.done [#allocation6], 4096
        $region40: #{tpu_custom_call.1} parent=31 // pred_fallthru
          _
        // Predicated region
        $region41: #{tpu_custom_call.1} parent=31 // pred_check
          %p191 = pneg %p84
        $region42: #{tpu_custom_call.1} parent=31 // pred_check_branch
          %193 = sbr.rel (%p191) target = $region44
        $region43: #{tpu_custom_call.1} parent=31 // pred_region
          %194 = dma.done [#allocation6], 128
        $region44: #{tpu_custom_call.1} parent=31 // pred_fallthru
          _
        %s195 = sand.u32 %s29, 1
        %s196 = scalar_lea.sflag [#allocation3], %s195
        %s197 = sand.u32 %s29, 1
        %s198 = smul.addr %s197, 8
        %s199 = scalar_lea.vmem [#allocation2], %s198
        %p200 = pneg %p42
        %p201 = pneg %p39
        %p202 = pneg %p63
        %p203 = pneg %p60
        %p204 = pneg %p84
        %p205 = pneg %p81
        %p206 = pneg %p110
        %p207 = pneg %p107
        %s208 = sand.u32 %s97, 1
        %s209 = scalar_lea.sflag [#allocation4], %s208
        %s210 = sand.u32 %s97, 1
        %s211 = smul.addr %s210, 8
        %s212 = scalar_lea.vmem [#allocation8], %s211
        %v213 = vld [vmem:[%s182] sm:$0xff]
        %v214 = vld [vmem:[#allocation5] sm:$0xff]
        %v215 = vld [vmem:[#allocation5 + $0x8] sm:$0xff]
        %v216 = vld [vmem:[#allocation5 + $0x10] sm:$0xff]
        %v217 = vld [vmem:[#allocation5 + $0x18] sm:$0xff]
        %v218 = vld [vmem:[#allocation5 + $0x20] sm:$0xff]
        %v219 = vld [vmem:[#allocation5 + $0x28] sm:$0xff]
        %v220 = vld [vmem:[#allocation5 + $0x30] sm:$0xff]
        %v221 = vld [vmem:[#allocation5 + $0x38] sm:$0xff]
        %v222 = vld [vmem:[#allocation5 + $0x40] sm:$0xff]
        %v223 = vld [vmem:[#allocation5 + $0x48] sm:$0xff]
        %v224 = vld [vmem:[#allocation5 + $0x50] sm:$0xff]
        %v225 = vld [vmem:[#allocation5 + $0x58] sm:$0xff]
        %v226 = vld [vmem:[#allocation5 + $0x60] sm:$0xff]
        %v227 = vld [vmem:[#allocation5 + $0x68] sm:$0xff]
        %v228 = vld [vmem:[#allocation5 + $0x70] sm:$0xff]
        %v229 = vld [vmem:[#allocation5 + $0x78] sm:$0xff]
        %v230 = vld [vmem:[#allocation5 + $0x80] sm:$0xff]
        %v231 = vld [vmem:[#allocation5 + $0x88] sm:$0xff]
        %v232 = vld [vmem:[#allocation5 + $0x90] sm:$0xff]
        %v233 = vld [vmem:[#allocation5 + $0x98] sm:$0xff]
        %v234 = vld [vmem:[#allocation5 + $0xa0] sm:$0xff]
        %v235 = vld [vmem:[#allocation5 + $0xa8] sm:$0xff]
        %v236 = vld [vmem:[#allocation5 + $0xb0] sm:$0xff]
        %v237 = vld [vmem:[#allocation5 + $0xb8] sm:$0xff]
        %v238 = vld [vmem:[#allocation5 + $0xc0] sm:$0xff]
        %v239 = vld [vmem:[#allocation5 + $0xc8] sm:$0xff]
        %v240 = vld [vmem:[#allocation5 + $0xd0] sm:$0xff]
        %v241 = vld [vmem:[#allocation5 + $0xd8] sm:$0xff]
        %v242 = vld [vmem:[#allocation5 + $0xe0] sm:$0xff]
        %v243 = vld [vmem:[#allocation5 + $0xe8] sm:$0xff]
        %v244 = vld [vmem:[#allocation5 + $0xf0] sm:$0xff]
        %v245 = vld [vmem:[#allocation5 + $0xf8] sm:$0xff]
        %246 = vmatprep.subr.mxu0 %v215
        %247 = vmatpush1.msra.mxu0 %v214
        %248 = vmatprep.subr.mxu0 %v217
        %249 = vmatpush1.msra.mxu0 %v216
        %250 = vmatprep.subr.mxu0 %v219
        %251 = vmatpush1.msra.mxu0 %v218
        %252 = vmatprep.subr.mxu0 %v221
        %253 = vmatpush1.msra.mxu0 %v220
        %254 = vmatprep.subr.mxu0 %v223
        %255 = vmatpush1.msra.mxu0 %v222
        %256 = vmatprep.subr.mxu0 %v225
        %257 = vmatpush1.msra.mxu0 %v224
        %258 = vmatprep.subr.mxu0 %v227
        %259 = vmatpush1.msra.mxu0 %v226
        %260 = vmatprep.subr.mxu0 %v229
        %261 = vmatpush1.msra.mxu0 %v228
        %262 = vmatprep.subr.mxu0 %v231
        %263 = vmatpush1.msra.mxu0 %v230
        %264 = vmatprep.subr.mxu0 %v233
        %265 = vmatpush1.msra.mxu0 %v232
        %266 = vmatprep.subr.mxu0 %v235
        %267 = vmatpush1.msra.mxu0 %v234
        %268 = vmatprep.subr.mxu0 %v237
        %269 = vmatpush1.msra.mxu0 %v236
        %270 = vmatprep.subr.mxu0 %v239
        %271 = vmatpush1.msra.mxu0 %v238
        %272 = vmatprep.subr.mxu0 %v241
        %273 = vmatpush1.msra.mxu0 %v240
        %274 = vmatprep.subr.mxu0 %v243
        %275 = vmatpush1.msra.mxu0 %v242
        %276 = vmatprep.subr.mxu0 %v245
        %277 = vmatpush1.msra.mxu0 %v244
        %278 = vmatprep.subr.mxu0 0.0
        %279 = vmatpush1.msra.mxu0 0.0
        %280 = vmatprep.subr.mxu0 0.0
        %281 = vmatpush1.msra.mxu0 0.0
        %282 = vmatprep.subr.mxu0 0.0
        %283 = vmatpush1.msra.mxu0 0.0
        %284 = vmatprep.subr.mxu0 0.0
        %285 = vmatpush1.msra.mxu0 0.0
        %286 = vmatprep.subr.mxu0 0.0
        %287 = vmatpush1.msra.mxu0 0.0
        %288 = vmatprep.subr.mxu0 0.0
        %289 = vmatpush1.msra.mxu0 0.0
        %290 = vmatprep.subr.mxu0 0.0
        %291 = vmatpush1.msra.mxu0 0.0
        %292 = vmatprep.subr.mxu0 0.0
        %293 = vmatpush1.msra.mxu0 0.0
        %294 = vmatprep.subr.mxu0 0.0
        %295 = vmatpush1.msra.mxu0 0.0
        %296 = vmatprep.subr.mxu0 0.0
        %297 = vmatpush1.msra.mxu0 0.0
        %298 = vmatprep.subr.mxu0 0.0
        %299 = vmatpush1.msra.mxu0 0.0
        %300 = vmatprep.subr.mxu0 0.0
        %301 = vmatpush1.msra.mxu0 0.0
        %302 = vmatprep.subr.mxu0 0.0
        %303 = vmatpush1.msra.mxu0 0.0
        %304 = vmatprep.subr.mxu0 0.0
        %305 = vmatpush1.msra.mxu0 0.0
        %306 = vmatprep.subr.mxu0 0.0
        %307 = vmatpush1.msra.mxu0 0.0
        %308 = vmatprep.subr.mxu0 0.0
        %309 = vmatpush1.msra.mxu0 0.0
        %310 = vmatprep.mubr.f32.mxu0 0.0
        %311 = vmatmul.mubr.f32.gmra.mrb[0].mxu0 %v213
        %v312 = vpop.f32.mrb[0].mxu0
        %v313 = vadd.f32 0.0, %v312
        %v314 = vpop.f32.mrb[0].mxu0
        %v315 = vadd.f32 0.0, %v314
        %316 = vdwg.mxu0
        %v317 = vld [vmem:[#allocation7] sm:$0xff]
        %vm318 = vcmask 130048
        %v320 = vsel %vm318, %v317, 0
        %322 = vmatprep.subr.mxu0 0.0
        %323 = vmatpush1.msra.mxu0 %v313
        %324 = vmatprep.subr.mxu0 0.0
        %325 = vmatpush1.msra.mxu0 %v315
        %326 = vmatprep.subr.mxu0 0.0
        %327 = vmatpush1.msra.mxu0 0.0
        %328 = vmatprep.subr.mxu0 0.0
        %329 = vmatpush1.msra.mxu0 0.0
        %330 = vmatprep.subr.mxu0 0.0
        %331 = vmatpush1.msra.mxu0 0.0
        %332 = vmatprep.subr.mxu0 0.0
        %333 = vmatpush1.msra.mxu0 0.0
        %334 = vmatprep.subr.mxu0 0.0
        %335 = vmatpush1.msra.mxu0 0.0
        %336 = vmatprep.subr.mxu0 0.0
        %337 = vmatpush1.msra.mxu0 0.0
        %338 = vmatprep.subr.mxu0 0.0
        %339 = vmatpush1.msra.mxu0 0.0
        %340 = vmatprep.subr.mxu0 0.0
        %341 = vmatpush1.msra.mxu0 0.0
        %342 = vmatprep.subr.mxu0 0.0
        %343 = vmatpush1.msra.mxu0 0.0
        %344 = vmatprep.subr.mxu0 0.0
        %345 = vmatpush1.msra.mxu0 0.0
        %346 = vmatprep.subr.mxu0 0.0
        %347 = vmatpush1.msra.mxu0 0.0
        %348 = vmatprep.subr.mxu0 0.0
        %349 = vmatpush1.msra.mxu0 0.0
        %350 = vmatprep.subr.mxu0 0.0
        %351 = vmatpush1.msra.mxu0 0.0
        %352 = vmatprep.subr.mxu0 0.0
        %353 = vmatpush1.msra.mxu0 0.0
        %354 = vmatprep.subr.mxu0 0.0
        %355 = vmatpush1.msra.mxu0 0.0
        %356 = vmatprep.subr.mxu0 0.0
        %357 = vmatpush1.msra.mxu0 0.0
        %358 = vmatprep.subr.mxu0 0.0
        %359 = vmatpush1.msra.mxu0 0.0
        %360 = vmatprep.subr.mxu0 0.0
        %361 = vmatpush1.msra.mxu0 0.0
        %362 = vmatprep.subr.mxu0 0.0
        %363 = vmatpush1.msra.mxu0 0.0
        %364 = vmatprep.subr.mxu0 0.0
        %365 = vmatpush1.msra.mxu0 0.0
        %366 = vmatprep.subr.mxu0 0.0
        %367 = vmatpush1.msra.mxu0 0.0
        %368 = vmatprep.subr.mxu0 0.0
        %369 = vmatpush1.msra.mxu0 0.0
        %370 = vmatprep.subr.mxu0 0.0
        %371 = vmatpush1.msra.mxu0 0.0
        %372 = vmatprep.subr.mxu0 0.0
        %373 = vmatpush1.msra.mxu0 0.0
        %374 = vmatprep.subr.mxu0 0.0
        %375 = vmatpush1.msra.mxu0 0.0
        %376 = vmatprep.subr.mxu0 0.0
        %377 = vmatpush1.msra.mxu0 0.0
        %378 = vmatprep.subr.mxu0 0.0
        %379 = vmatpush1.msra.mxu0 0.0
        %380 = vmatprep.subr.mxu0 0.0
        %381 = vmatpush1.msra.mxu0 0.0
        %382 = vmatprep.subr.mxu0 0.0
        %383 = vmatpush1.msra.mxu0 0.0
        %384 = vmatprep.subr.mxu0 0.0
        %385 = vmatpush1.msra.mxu0 0.0
        %386 = vmatprep.mubr.f32.mxu0 0.0
        %387 = vmatmul.mubr.f32.gmra.mrb[0].mxu0 %v320
        %v388 = vpop.f32.mrb[0].mxu0
        %v389 = vadd.f32 0.0, %v388
        %v390 = vpop.f32.mrb[0].mxu0
        %391 = vdwg.mxu0
        %392 = vst [vmem:[%s212] sm:$0xff] %v389
        %s393 = sand.u32 %s97, 1
        %s394 = scalar_lea.sflag [#allocation4], %s393
        %s395 = sand.u32 %s97, 1
        %s396 = smul.addr %s395, 8
        %s397 = scalar_lea.vmem [#allocation8], %s396
        // Predicated region
        $region45: #{tpu_custom_call.1} parent=31 // pred_check
          %p398 = pneg %p107
        $region46: #{tpu_custom_call.1} parent=31 // pred_check_branch
          %400 = sbr.rel (%p398) target = $region48
        $region47: #{tpu_custom_call.1} parent=31 // pred_region
          %s402 = ssub.s32 128, 128
          %403 = vsyncadd %s394, %s402
          %s404 = smul.addr %s21, 128
          %s405 = scalar_lea.hbm %s3, %s404
          %s407 = sshll.u32 %s397, 4
          %s408 = int_to_ptr.vmem [resolvable:$true] %s407
          %410 = dma.vmem_to_hbm [thread:$0]  %s408, 128, %s405, %s394
        $region48: #{tpu_custom_call.1} parent=31 // pred_fallthru
          _
      $region32: #{tpu_custom_call.1} parent=5 // pred_fallthru
        _
      %p411 = scmp.le.s32.totalorder 2, %s16
      // Predicated region
      $region49: #{tpu_custom_call.1} parent=5 // pred_check
        %p412 = pneg %p411
      $region50: #{tpu_custom_call.1} parent=5 // pred_check_branch
        %414 = sbr.rel (%p412) target = $region52
      $region51: #{tpu_custom_call.1} parent=5 // pred_region
        %s415 = ssub.s32 %s16, 2
        // Predicated region
        $region53: #{tpu_custom_call.1} parent=51 // pred_check
          %p416 = pneg %p113
        $region54: #{tpu_custom_call.1} parent=51 // pred_check_branch
          %418 = sbr.rel (%p416) target = $region56
        $region55: #{tpu_custom_call.1} parent=51 // pred_region
          %s419 = sand.u32 %s98, 1
          %s420 = scalar_lea.sflag [#allocation4], %s419
          %s421 = sand.u32 %s98, 1
          %s422 = smul.addr %s421, 8
          %s423 = scalar_lea.vmem [#allocation8], %s422
          %424 = dma.done %s420, 128
        $region56: #{tpu_custom_call.1} parent=51 // pred_fallthru
          _
      $region52: #{tpu_custom_call.1} parent=5 // pred_fallthru
        _
    $region6: #{tpu_custom_call.1} parent=1 // loop_footer
      %s20 = sadd.s32 1, %s16
    $region7: #{tpu_custom_call.1} parent=1 // loop_footer_branch
      %15 = sbr.rel target = $region3
    $region8: #{tpu_custom_call.1} parent=1 // loop_exit
      _
    %425 = vsyncpa [#allocation3], 1
    %s426 = scalar_lea.sflag [#allocation3], 1
    %427 = vsyncpa %s426, 1
    %428 = vsyncpa [#allocation6], 1
    %429 = vsyncpa [#allocation4], 1
    %s430 = scalar_lea.sflag [#allocation4], 1
    %431 = vsyncpa %s430, 1

</llo_original>
